<compile_context>
chip_gen: v7x
topology: tpu7x:2x2x1
jax: 0.10.0
libtpu: 0.0.40
codegen_flags: <defaults>
</compile_context>

<pallas_src>
import math

import jax
import jax.numpy as jnp
from jax import lax
from jax.experimental import pallas as pl
from jax.experimental.pallas import tpu as pltpu


# Large finite negative for masked logits (exp(MASK - real_max) underflows to 0).
_MASK_VALUE = -0.7 * float(jnp.finfo(jnp.float32).max)


def _round_up(x: int, m: int) -> int:
    return ((x + m - 1) // m) * m


def _flash_body(q_ref, k_ref, v_ref, o_ref, m_sc, l_sc, acc_sc, scale, mask_tile):
    """One (tq, tk) online-softmax step for the current (bh, q-tile) grid point."""
    j = pl.program_id(2)

    @pl.when(j == 0)
    def _init():
        m_sc[...] = jnp.full(m_sc.shape, -jnp.inf, dtype=m_sc.dtype)
        l_sc[...] = jnp.zeros(l_sc.shape, dtype=l_sc.dtype)
        acc_sc[...] = jnp.zeros(acc_sc.shape, dtype=acc_sc.dtype)

    q = q_ref[0] * scale                     # (tq, Dp), native dtype, scale folded in
    k = k_ref[0]                             # (tk, Dp)

    # scores = Q @ K^T, contracting the D dims directly (no explicit transpose).
    s = lax.dot_general(q, k, (((1,), (1,)), ((), ())),
                        preferred_element_type=jnp.float32)     # (tq, tk) f32

    if mask_tile is not None:
        s = jnp.where(mask_tile, s, _MASK_VALUE)

    m_prev = m_sc[...]                                  # (tq, 1)
    m_cur = jnp.max(s, axis=-1, keepdims=True)          # (tq, 1)
    m_new = jnp.maximum(m_prev, m_cur)
    alpha = jnp.exp(m_prev - m_new)                     # rescale of old stats
    p = jnp.exp(s - m_new)                              # (tq, tk)

    l_sc[...] = alpha * l_sc[...] + jnp.sum(p, axis=-1, keepdims=True)
    acc_sc[...] = alpha * acc_sc[...] + jnp.dot(
        p.astype(v_ref.dtype), v_ref[0], preferred_element_type=jnp.float32)
    m_sc[...] = m_new

    @pl.when(j == pl.num_programs(2) - 1)
    def _finalize():
        inv_l = pl.reciprocal(l_sc[...], approx=True)   # EUP slot, nearly free
        o_ref[0] = (acc_sc[...] * inv_l).astype(o_ref.dtype)


def _make_kernel(scale, has_mask, kv_valid, tq, tk):
    """kv_valid: # of real (non-padded) keys, or None if no key padding (or the
    padding is already covered by the user mask)."""
    def kernel(*refs):
        if has_mask:
            q_ref, k_ref, v_ref, mask_ref, o_ref, m_sc, l_sc, acc_sc = refs
            mask_tile = mask_ref[0] != 0                # int8 -> bool, (tq, tk)
        else:
            q_ref, k_ref, v_ref, o_ref, m_sc, l_sc, acc_sc = refs
            mask_tile = None
            if kv_valid is not None:                    # mask zero-padded keys
                col = pl.program_id(2) * tk + lax.broadcasted_iota(
                    jnp.int32, (tq, tk), 1)
                mask_tile = col < kv_valid
        _flash_body(q_ref, k_ref, v_ref, o_ref, m_sc, l_sc, acc_sc, scale,
                    mask_tile)
    return kernel


def scaled_product_attn(query, key, value, attn_mask=None, *,
                        block_q=256, block_k=512):
    """query: (B, H, Sq, D); key/value: (B, H, Sk, D); attn_mask: bool,
    broadcastable to (B, H, Sq, Sk) (True = keep). Returns (B, H, Sq, D)."""
    B, H, Sq, D = query.shape
    Sk = key.shape[2]
    assert D != 0
    BH = B * H

    # Tile sizes / padded extents (lane-dense: last dims are multiples of 128).
    Dp = _round_up(D, 128)
    tq = min(block_q, _round_up(Sq, 8))
    Sq_p = _round_up(Sq, tq)
    tk = min(block_k, _round_up(Sk, 128))
    Sk_p = _round_up(Sk, tk)

    def _pad3(x, s_pad, d_pad):
        s, d = x.shape[1], x.shape[2]
        if s_pad != s or d_pad != d:
            x = jnp.pad(x, ((0, 0), (0, s_pad - s), (0, d_pad - d)))
        return x

    q = _pad3(query.reshape(BH, Sq, D), Sq_p, Dp)
    k = _pad3(key.reshape(BH, Sk, D), Sk_p, Dp)
    v = _pad3(value.reshape(BH, Sk, D), Sk_p, Dp)

    has_mask = attn_mask is not None
    args = [q, k, v]
    in_specs = [
        pl.BlockSpec((1, tq, Dp), lambda b, i, j: (b, i, 0)),
        pl.BlockSpec((1, tk, Dp), lambda b, i, j: (b, j, 0)),
        pl.BlockSpec((1, tk, Dp), lambda b, i, j: (b, j, 0)),
    ]

    kv_valid = None
    if has_mask:
        am = attn_mask
        while am.ndim < 4:
            am = am[None]
        shared_bh = (am.shape[0] == 1 and am.shape[1] == 1)
        if shared_bh:
            # Single copy; broadcast across (B,H) via the index_map (no HBM blowup).
            m2 = jnp.broadcast_to(am, (1, 1, Sq, Sk)).reshape(1, Sq, Sk)
        else:
            m2 = jnp.broadcast_to(am, (B, H, Sq, Sk)).reshape(BH, Sq, Sk)
        m2 = m2.astype(jnp.int8)                        # 4x less HBM traffic than f32
        if Sq_p != Sq or Sk_p != Sk:
            m2 = jnp.pad(m2, ((0, 0), (0, Sq_p - Sq), (0, Sk_p - Sk)))
        args.append(m2)
        if shared_bh:
            in_specs.append(pl.BlockSpec((1, tq, tk), lambda b, i, j: (0, i, j)))
        else:
            in_specs.append(pl.BlockSpec((1, tq, tk), lambda b, i, j: (b, i, j)))
    elif Sk_p != Sk:
        kv_valid = Sk   # mask zero-padded keys in-kernel (no mask DMA at all)

    scale = 1.0 / math.sqrt(D)
    kernel = _make_kernel(scale, has_mask, kv_valid, tq, tk)

    out = pl.pallas_call(
        kernel,
        out_shape=jax.ShapeDtypeStruct((BH, Sq_p, Dp), query.dtype),
        grid_spec=pltpu.PrefetchScalarGridSpec(
            num_scalar_prefetch=0,
            grid=(BH, Sq_p // tq, Sk_p // tk),
            in_specs=in_specs,
            out_specs=pl.BlockSpec((1, tq, Dp), lambda b, i, j: (b, i, 0)),
            scratch_shapes=[
                pltpu.VMEM((tq, 1), jnp.float32),    # running max m
                pltpu.VMEM((tq, 1), jnp.float32),    # running denominator l
                pltpu.VMEM((tq, Dp), jnp.float32),   # running numerator acc
            ],
        ),
        compiler_params=pltpu.CompilerParams(
            dimension_semantics=("parallel", "parallel", "arbitrary"),
            vmem_limit_bytes=32 * 1024 * 1024,
        ),
    )(*args)

    return out[:, :Sq, :D].reshape(B, H, Sq, D)


def _reference(query, key, value, attn_mask=None):
    d_k = query.shape[-1]
    attn = jnp.matmul(query, jnp.swapaxes(key, -1, -2),
                      precision=lax.Precision.HIGHEST) / math.sqrt(d_k)
    if attn_mask is not None:
        attn = jnp.where(attn_mask, attn, -jnp.inf)
    attn = jax.nn.softmax(attn, axis=-1)
    return jnp.matmul(attn, value, precision=lax.Precision.HIGHEST)


if __name__ == "__main__":
    key0 = jax.random.PRNGKey(0)
    kq, kk, kv, km = jax.random.split(key0, 4)

    # Small shapes consistent with the module: (B, H, S, D).
    B, H, S, D = 2, 4, 8, 32
    q = jax.random.normal(kq, (B, H, S, D), jnp.float32)
    k = jax.random.normal(kk, (B, H, S, D), jnp.float32)
    v = jax.random.normal(kv, (B, H, S, D), jnp.float32)
    # Boolean mask with at least one True per row (fully-masked rows are NaN in
    # the PyTorch reference; the kernel intentionally returns finite values).
    mask = jax.random.bernoulli(km, 0.8, (B, H, S, S))
    mask = mask.at[..., 0].set(True)

    # Tolerance accounts for the approx (EUP) reciprocal in the kernel epilogue.
    tol = dict(atol=5e-3, rtol=5e-3)

    out = scaled_product_attn(q, k, v, mask)
    jax.block_until_ready(out)
    ref = _reference(q, k, v, mask)
    assert out.shape == (B, H, S, D)
    assert jnp.allclose(out, ref, **tol), float(jnp.max(jnp.abs(out - ref)))

    # No-mask path (also exercises in-kernel masking of zero-padded keys).
    out_nm = scaled_product_attn(q, k, v, None)
    jax.block_until_ready(out_nm)
    ref_nm = _reference(q, k, v, None)
    assert jnp.allclose(out_nm, ref_nm, **tol), float(
        jnp.max(jnp.abs(out_nm - ref_nm)))

    # Multi-tile path: several q tiles and k tiles (online softmax across k tiles).
    B2, H2, Sq2, Sk2, D2 = 1, 2, 64, 256, 64
    k2q, k2k, k2v, k2m = jax.random.split(jax.random.PRNGKey(1), 4)
    q2 = jax.random.normal(k2q, (B2, H2, Sq2, D2), jnp.float32)
    kk2 = jax.random.normal(k2k, (B2, H2, Sk2, D2), jnp.float32)
    v2 = jax.random.normal(k2v, (B2, H2, Sk2, D2), jnp.float32)
    m2 = jax.random.bernoulli(k2m, 0.7, (B2, H2, Sq2, Sk2)).at[..., 0].set(True)

    out2 = scaled_product_attn(q2, kk2, v2, m2, block_q=32, block_k=128)
    jax.block_until_ready(out2)
    ref2 = _reference(q2, kk2, v2, m2)
    assert jnp.allclose(out2, ref2, **tol), float(jnp.max(jnp.abs(out2 - ref2)))

    out2_nm = scaled_product_attn(q2, kk2, v2, None, block_q=32, block_k=128)
    jax.block_until_ready(out2_nm)
    ref2_nm = _reference(q2, kk2, v2, None)
    assert jnp.allclose(out2_nm, ref2_nm, **tol), float(
        jnp.max(jnp.abs(out2_nm - ref2_nm)))

    print("KERNEL_OK")
</pallas_src>

<mosaic_0001>
module attributes {stable_mosaic.version = 11 : i64} {
  func.func @kernel(%arg0: i32, %arg1: i32, %arg2: i32, %arg3: memref<1x8x128xf32, #tpu.memory_space<vmem>>, %arg4: memref<1x128x128xf32, #tpu.memory_space<vmem>>, %arg5: memref<1x128x128xf32, #tpu.memory_space<vmem>>, %arg6: memref<1x8x128xi8, #tpu.memory_space<vmem>>, %arg7: memref<1x8x128xf32, #tpu.memory_space<vmem>>, %arg8: memref<8x1xf32, #tpu.memory_space<vmem>>, %arg9: memref<8x1xf32, #tpu.memory_space<vmem>>, %arg10: memref<8x128xf32, #tpu.memory_space<vmem>>) attributes {dimension_semantics = [#tpu.dimension_semantics<parallel>, #tpu.dimension_semantics<parallel>, #tpu.dimension_semantics<arbitrary>], iteration_bounds = array<i64: 8, 1, 1>, scalar_prefetch = 0 : i64, scratch_operands = 3 : i64, tpu.core_type = #tpu.core_type<tc>, window_params = [{transform_indices = @transform_0, window_bounds = array<i64: 1, 8, 128>}, {transform_indices = @transform_1, window_bounds = array<i64: 1, 128, 128>}, {transform_indices = @transform_2, window_bounds = array<i64: 1, 128, 128>}, {transform_indices = @transform_3, window_bounds = array<i64: 1, 8, 128>}, {transform_indices = @transform_4, window_bounds = array<i64: 1, 8, 128>}]} {
    %c0 = arith.constant 0 : index
    %c0_0 = arith.constant 0 : index
    %c0_1 = arith.constant 0 : index
    %0 = vector.load %arg6[%c0, %c0_0, %c0_1] : memref<1x8x128xi8, #tpu.memory_space<vmem>>, vector<1x8x128xi8>
    %1 = vector.shape_cast %0 : vector<1x8x128xi8> to vector<8x128xi8>
    %c0_i8 = arith.constant 0 : i8
    %2 = vector.broadcast %c0_i8 : i8 to vector<8x128xi8>
    %3 = arith.cmpi ne, %1, %2 : vector<8x128xi8>
    %c0_i32 = arith.constant 0 : i32
    %4 = arith.cmpi eq, %arg2, %c0_i32 : i32
    %5 = arith.extui %4 : i1 to i32
    %c0_i32_2 = arith.constant 0 : i32
    %6 = arith.cmpi ne, %5, %c0_i32_2 : i32
    scf.if %6 {
      %cst_31 = arith.constant 0xFF800000 : f32
      %43 = vector.broadcast %cst_31 : f32 to vector<8x1xf32>
      %c0_32 = arith.constant 0 : index
      %c0_33 = arith.constant 0 : index
      %44 = vector.load %arg8[%c0_32, %c0_33] : memref<8x1xf32, #tpu.memory_space<vmem>>, vector<8x1xf32>
      tpu.vector_store %arg8[%c0_32, %c0_33], %43 {strides = array<i32>} : memref<8x1xf32, #tpu.memory_space<vmem>>, vector<8x1xf32>,
      %cst_34 = arith.constant 0.000000e+00 : f32
      %45 = vector.broadcast %cst_34 : f32 to vector<8x1xf32>
      %c0_35 = arith.constant 0 : index
      %c0_36 = arith.constant 0 : index
      %46 = vector.load %arg9[%c0_35, %c0_36] : memref<8x1xf32, #tpu.memory_space<vmem>>, vector<8x1xf32>
      tpu.vector_store %arg9[%c0_35, %c0_36], %45 {strides = array<i32>} : memref<8x1xf32, #tpu.memory_space<vmem>>, vector<8x1xf32>,
      %cst_37 = arith.constant 0.000000e+00 : f32
      %47 = vector.broadcast %cst_37 : f32 to vector<8x128xf32>
      %c0_38 = arith.constant 0 : index
      %c0_39 = arith.constant 0 : index
      %48 = vector.load %arg10[%c0_38, %c0_39] : memref<8x128xf32, #tpu.memory_space<vmem>>, vector<8x128xf32>
      tpu.vector_store %arg10[%c0_38, %c0_39], %47 {strides = array<i32>} : memref<8x128xf32, #tpu.memory_space<vmem>>, vector<8x128xf32>,
    } else {
    }
    %c0_3 = arith.constant 0 : index
    %c0_4 = arith.constant 0 : index
    %c0_5 = arith.constant 0 : index
    %7 = vector.load %arg3[%c0_3, %c0_4, %c0_5] : memref<1x8x128xf32, #tpu.memory_space<vmem>>, vector<1x8x128xf32>
    %8 = vector.shape_cast %7 : vector<1x8x128xf32> to vector<8x128xf32>
    %cst = arith.constant 0.176776692 : f32
    %9 = vector.broadcast %cst : f32 to vector<8x128xf32>
    %10 = arith.mulf %8, %9 : vector<8x128xf32>
    %c0_6 = arith.constant 0 : index
    %c0_7 = arith.constant 0 : index
    %c0_8 = arith.constant 0 : index
    %11 = vector.load %arg4[%c0_6, %c0_7, %c0_8] : memref<1x128x128xf32, #tpu.memory_space<vmem>>, vector<1x128x128xf32>
    %12 = vector.shape_cast %11 : vector<1x128x128xf32> to vector<128x128xf32>
    %cst_9 = arith.constant dense<0.000000e+00> : vector<8x128xf32>
    %13 = tpu.matmul %10, %12, %cst_9 {dimension_numbers = #tpu.dot_dimension_numbers<[1], [1], [0], [0], [0, 0, 1, 0], [], []>} : vector<8x128xf32>, vector<128x128xf32>, vector<8x128xf32> -> vector<8x128xf32>
    %cst_10 = arith.constant -2.38197633E+38 : f32
    %14 = vector.broadcast %cst_10 : f32 to vector<8x128xf32>
    %15 = arith.select %3, %13, %14 : vector<8x128xi1>, vector<8x128xf32>
    %c0_11 = arith.constant 0 : index
    %c0_12 = arith.constant 0 : index
    %16 = vector.load %arg8[%c0_11, %c0_12] : memref<8x1xf32, #tpu.memory_space<vmem>>, vector<8x1xf32>
    %cst_13 = arith.constant dense<0xFF800000> : vector<8xf32>
    %17 = vector.multi_reduction <maximumf>, %15, %cst_13 [1] : vector<8x128xf32> to vector<8xf32>
    %18 = vector.shape_cast %17 : vector<8xf32> to vector<8x1xf32>
    %19 = arith.maximumf %16, %18 : vector<8x1xf32>
    %20 = arith.subf %16, %19 : vector<8x1xf32>
    %21 = math.exp %20 : vector<8x1xf32>
    %22 = vector.broadcast %19 : vector<8x1xf32> to vector<8x128xf32>
    %23 = arith.subf %15, %22 : vector<8x128xf32>
    %24 = math.exp %23 : vector<8x128xf32>
    %c0_14 = arith.constant 0 : index
    %c0_15 = arith.constant 0 : index
    %25 = vector.load %arg9[%c0_14, %c0_15] : memref<8x1xf32, #tpu.memory_space<vmem>>, vector<8x1xf32>
    %26 = arith.mulf %21, %25 : vector<8x1xf32>
    %cst_16 = arith.constant dense<0.000000e+00> : vector<8xf32>
    %27 = vector.multi_reduction <add>, %24, %cst_16 [1] : vector<8x128xf32> to vector<8xf32>
    %28 = vector.shape_cast %27 : vector<8xf32> to vector<8x1xf32>
    %29 = arith.addf %26, %28 : vector<8x1xf32>
    %c0_17 = arith.constant 0 : index
    %c0_18 = arith.constant 0 : index
    %30 = vector.load %arg9[%c0_17, %c0_18] : memref<8x1xf32, #tpu.memory_space<vmem>>, vector<8x1xf32>
    tpu.vector_store %arg9[%c0_17, %c0_18], %29 {strides = array<i32>} : memref<8x1xf32, #tpu.memory_space<vmem>>, vector<8x1xf32>,
    %c0_19 = arith.constant 0 : index
    %c0_20 = arith.constant 0 : index
    %31 = vector.load %arg10[%c0_19, %c0_20] : memref<8x128xf32, #tpu.memory_space<vmem>>, vector<8x128xf32>
    %32 = vector.broadcast %21 : vector<8x1xf32> to vector<8x128xf32>
    %33 = arith.mulf %32, %31 : vector<8x128xf32>
    %c0_21 = arith.constant 0 : index
    %c0_22 = arith.constant 0 : index
    %c0_23 = arith.constant 0 : index
    %34 = vector.load %arg5[%c0_21, %c0_22, %c0_23] : memref<1x128x128xf32, #tpu.memory_space<vmem>>, vector<1x128x128xf32>
    %35 = vector.shape_cast %34 : vector<1x128x128xf32> to vector<128x128xf32>
    %cst_24 = arith.constant dense<0.000000e+00> : vector<8x128xf32>
    %36 = tpu.matmul %24, %35, %cst_24 {dimension_numbers = #tpu.dot_dimension_numbers<[1], [0], [0], [1], [0, 0, 1, 1], [], []>} : vector<8x128xf32>, vector<128x128xf32>, vector<8x128xf32> -> vector<8x128xf32>
    %37 = arith.addf %33, %36 : vector<8x128xf32>
    %c0_25 = arith.constant 0 : index
    %c0_26 = arith.constant 0 : index
    %38 = vector.load %arg10[%c0_25, %c0_26] : memref<8x128xf32, #tpu.memory_space<vmem>>, vector<8x128xf32>
    tpu.vector_store %arg10[%c0_25, %c0_26], %37 {strides = array<i32>} : memref<8x128xf32, #tpu.memory_space<vmem>>, vector<8x128xf32>,
    %c0_27 = arith.constant 0 : index
    %c0_28 = arith.constant 0 : index
    %39 = vector.load %arg8[%c0_27, %c0_28] : memref<8x1xf32, #tpu.memory_space<vmem>>, vector<8x1xf32>
    tpu.vector_store %arg8[%c0_27, %c0_28], %19 {strides = array<i32>} : memref<8x1xf32, #tpu.memory_space<vmem>>, vector<8x1xf32>,
    %c0_i32_29 = arith.constant 0 : i32
    %40 = arith.cmpi eq, %arg2, %c0_i32_29 : i32
    %41 = arith.extui %40 : i1 to i32
    %c0_i32_30 = arith.constant 0 : i32
    %42 = arith.cmpi ne, %41, %c0_i32_30 : i32
    scf.if %42 {
      %c0_31 = arith.constant 0 : index
      %c0_32 = arith.constant 0 : index
      %43 = vector.load %arg9[%c0_31, %c0_32] : memref<8x1xf32, #tpu.memory_space<vmem>>, vector<8x1xf32>
      %44 = tpu.reciprocal %43 {approx = true} : vector<8x1xf32> -> vector<8x1xf32>
      %c0_33 = arith.constant 0 : index
      %c0_34 = arith.constant 0 : index
      %45 = vector.load %arg10[%c0_33, %c0_34] : memref<8x128xf32, #tpu.memory_space<vmem>>, vector<8x128xf32>
      %46 = vector.broadcast %44 : vector<8x1xf32> to vector<8x128xf32>
      %47 = arith.mulf %45, %46 : vector<8x128xf32>
      %c0_35 = arith.constant 0 : index
      %c0_36 = arith.constant 0 : index
      %c0_37 = arith.constant 0 : index
      %48 = vector.load %arg7[%c0_35, %c0_36, %c0_37] : memref<1x8x128xf32, #tpu.memory_space<vmem>>, vector<1x8x128xf32>
      %49 = vector.shape_cast %48 : vector<1x8x128xf32> to vector<8x128xf32>
      %50 = vector.shape_cast %47 : vector<8x128xf32> to vector<1x8x128xf32>
      tpu.vector_store %arg7[%c0_35, %c0_36, %c0_37], %50 {strides = array<i32>} : memref<1x8x128xf32, #tpu.memory_space<vmem>>, vector<1x8x128xf32>,
    } else {
    }
    return
  }
  func.func @transform_0(%arg0: i32, %arg1: i32, %arg2: i32) -> (i32, i32, i32) {
    %c0_i32 = arith.constant 0 : i32
    %c0_i32_0 = arith.constant 0 : i32
    return %arg0, %arg1, %c0_i32 : i32, i32, i32
  }
  func.func @transform_1(%arg0: i32, %arg1: i32, %arg2: i32) -> (i32, i32, i32) {
    %c0_i32 = arith.constant 0 : i32
    %c0_i32_0 = arith.constant 0 : i32
    return %arg0, %arg2, %c0_i32 : i32, i32, i32
  }
  func.func @transform_2(%arg0: i32, %arg1: i32, %arg2: i32) -> (i32, i32, i32) {
    %c0_i32 = arith.constant 0 : i32
    %c0_i32_0 = arith.constant 0 : i32
    return %arg0, %arg2, %c0_i32 : i32, i32, i32
  }
  func.func @transform_3(%arg0: i32, %arg1: i32, %arg2: i32) -> (i32, i32, i32) {
    %c0_i32 = arith.constant 0 : i32
    return %arg0, %arg1, %arg2 : i32, i32, i32
  }
  func.func @transform_4(%arg0: i32, %arg1: i32, %arg2: i32) -> (i32, i32, i32) {
    %c0_i32 = arith.constant 0 : i32
    %c0_i32_0 = arith.constant 0 : i32
    return %arg0, %arg1, %c0_i32 : i32, i32, i32
  }
}

</mosaic_0001>

<llo_original>
// kernel: tpu_custom_call.1
$region0: #{tpu_custom_call.1}
  #allocation0 [shape = 'u32[]', space=smem, size = 0x4, offset = 0x4, fixed_abs, tag = 'smem constant byte address 0x4 - core index']
  #allocation1 [shape = 'u32[144,128]{1,0:T(1,128)}', space=vmem, size = 0x12000, scoped, tag = 'internal scratch']
  #allocation2 [shape = 'f32[8,1]{1,0:T(8,128)}', space=vmem, size = 0x1000, scoped, tag = 'scratch operand']
  #allocation3 [shape = 'f32[8,1]{1,0:T(8,128)}', space=vmem, size = 0x1000, scoped, tag = 'scratch operand']
  #allocation4 [shape = 'f32[8,128]{1,0:T(8,128)}', space=vmem, size = 0x1000, scoped, tag = 'scratch operand']
  %s0 = inlined_call_operand.hbm [shape: f32[8,8,128], index: 0, kind: input, shape index: {}]
  %s1 = inlined_call_operand.hbm [shape: f32[8,128,128], index: 1, kind: input, shape index: {}]
  %s2 = inlined_call_operand.hbm [shape: f32[8,128,128], index: 2, kind: input, shape index: {}]
  %s3 = inlined_call_operand.hbm [shape: s8[8,8,128], index: 3, kind: input, shape index: {}]
  %s4 = inlined_call_operand.hbm [shape: f32[8,8,128], index: 4, kind: output, shape index: {}]
  %s5 = sld [smem:[#allocation0]]
  $region73: #{tpu_custom_call.1} parent=0
    _
  %s7 = ssub.s32 1, %s5
  %s8 = scalar_select 0, %s7, %s5
  $region1: #{tpu_custom_call.1} parent=0
    #allocation5 [shape = 'u8[8192]{0}', space=vmem, size = 0x2000, scoped, tag = 'input window, operand 0']
    #allocation6 [shape = 's32[2]{0}', space=sflag, size = 0x8, scoped, tag = 'scoped memory for tpu_custom_call.1']
    #allocation7 [shape = 's32[2]{0}', space=sflag, size = 0x8, scoped, tag = 'scoped memory for tpu_custom_call.1']
    #allocation8 [shape = 'u8[131072]{0}', space=vmem, size = 0x20000, scoped, tag = 'input window, operand 1']
    #allocation9 [shape = 's32[2]{0}', space=sflag, size = 0x8, scoped, tag = 'scoped memory for tpu_custom_call.1']
    #allocation10 [shape = 'u8[131072]{0}', space=vmem, size = 0x20000, scoped, tag = 'input window, operand 2']
    #allocation11 [shape = 'u8[2048]{0}', space=vmem, size = 0x800, scoped, tag = 'input window, operand 3']
    #allocation12 [shape = 's32[2]{0}', space=sflag, size = 0x8, scoped, tag = 'scoped memory for tpu_custom_call.1']
    #allocation13 [shape = 'u8[8192]{0}', space=vmem, size = 0x2000, scoped, tag = 'output window, operand 0']
    %9 = vsyncpa [#allocation6], 0
    %s10 = scalar_lea.sflag [#allocation6], 1
    %11 = vsyncpa %s10, 0
    %12 = vsyncpa [#allocation9], 0
    %s13 = scalar_lea.sflag [#allocation9], 1
    %14 = vsyncpa %s13, 0
    %15 = vsyncpa [#allocation12], 0
    %s16 = scalar_lea.sflag [#allocation12], 1
    %17 = vsyncpa %s16, 0
    %18 = vsyncpa [#allocation7], 0
    %s19 = scalar_lea.sflag [#allocation7], 1
    %20 = vsyncpa %s19, 0
    loop: start=0, step=1, limit=10
    $region2: #{tpu_custom_call.1} parent=1 // loop_pre_header
      _
    $region3: #{tpu_custom_call.1} parent=1 // loop_header
      %s22 = sphi 0, %s26
      %p23 = scmp.ge.s32.totalorder %s22, 10
      %s29 = sphi 0, %s48
      %s30 = sphi 0, %s44
      %s31 = sphi 0, %s40
      %s32 = sphi 0, %s29
      %s33 = sphi 0, %s30
      %s34 = sphi 0, %s31
      %s35 = sphi 0, %s32
      %s36 = sphi 0, %s33
      %s37 = sphi 0, %s34
      %s53 = sphi 0, %s55
      %s56 = sphi 0, %s53
      %s57 = sphi 0, %s56
      %s73 = sphi 0, %s57
      %s81 = sphi 0, %s83
      %s84 = sphi 0, %s81
      %s85 = sphi 0, %s84
      %s101 = sphi 0, %s85
      %s109 = sphi 0, %s111
      %s112 = sphi 0, %s109
      %s113 = sphi 0, %s112
      %s129 = sphi 0, %s113
      %s139 = sphi 0, %s141
      %s142 = sphi 0, %s139
      %s143 = sphi 0, %s142
      %s159 = sphi 0, %s143
      %s167 = sphi 0, %s169
      %s170 = sphi 0, %s167
      %s171 = sphi 0, %s170
      %s187 = sphi 0, %s171
    $region4: #{tpu_custom_call.1} parent=1 // loop_header_branch
      %25 = sbr.rel (%p23) target = $region8
    $region5: #{tpu_custom_call.1} parent=1 // loop_body
      %s27 = ssub.s32 %s22, 1
      %s28 = ssub.s32 %s22, 2
      %s38 = sadd.s32 1, %s31
      %p39 = scmp.ge.s32.totalorder %s38, 1
      %s40 = scalar_select %p39, 0, %s38
      %s41 = sadd.s32 1, %s30
      %s42 = scalar_select %p39, %s41, %s30
      %p43 = scmp.ge.s32.totalorder %s42, 1
      %s44 = scalar_select %p43, 0, %s42
      %s45 = sadd.s32 1, %s29
      %s46 = scalar_select %p43, %s45, %s29
      %p47 = scmp.ge.s32.totalorder %s46, 8
      %s48 = scalar_select %p47, 0, %s46
      %s49 = ssub.s32 %s29, %s48
      %s50 = ssub.s32 %s30, %s44
      %s51 = sor.u32 %s49, %s50
      %p52 = scmp.eq.s32.totalorder %s51, 0
      %s54 = sadd.s32 %s53, 1
      %s55 = scalar_select %p52, %s53, %s54
      %p58 = pneg %p52
      %p59 = scmp.eq.s32.totalorder %s22, 7
      %p60 = por %p58, %p59
      %p61 = scmp.ne.s32.totalorder %s53, %s56
      %p62 = scmp.eq.s32.totalorder %s22, 0
      %p63 = por %p61, %p62
      %p64 = scmp.ne.s32.totalorder %s53, %s56
      %p65 = scmp.eq.s32.totalorder %s27, 7
      %p66 = por %p64, %p65
      %p67 = scmp.ne.s32.totalorder %s56, %s57
      %p68 = scmp.eq.s32.totalorder %s27, 0
      %p69 = por %p67, %p68
      %p70 = scmp.ne.s32.totalorder %s56, %s57
      %p71 = scmp.eq.s32.totalorder %s28, 7
      %p72 = por %p70, %p71
      %p74 = scmp.ne.s32.totalorder %s57, %s73
      %p75 = scmp.eq.s32.totalorder %s28, 0
      %p76 = por %p74, %p75
      %s77 = ssub.s32 %s29, %s48
      %s78 = ssub.s32 %s31, %s40
      %s79 = sor.u32 %s77, %s78
      %p80 = scmp.eq.s32.totalorder %s79, 0
      %s82 = sadd.s32 %s81, 1
      %s83 = scalar_select %p80, %s81, %s82
      %p86 = pneg %p80
      %p87 = scmp.eq.s32.totalorder %s22, 7
      %p88 = por %p86, %p87
      %p89 = scmp.ne.s32.totalorder %s81, %s84
      %p90 = scmp.eq.s32.totalorder %s22, 0
      %p91 = por %p89, %p90
      %p92 = scmp.ne.s32.totalorder %s81, %s84
      %p93 = scmp.eq.s32.totalorder %s27, 7
      %p94 = por %p92, %p93
      %p95 = scmp.ne.s32.totalorder %s84, %s85
      %p96 = scmp.eq.s32.totalorder %s27, 0
      %p97 = por %p95, %p96
      %p98 = scmp.ne.s32.totalorder %s84, %s85
      %p99 = scmp.eq.s32.totalorder %s28, 7
      %p100 = por %p98, %p99
      %p102 = scmp.ne.s32.totalorder %s85, %s101
      %p103 = scmp.eq.s32.totalorder %s28, 0
      %p104 = por %p102, %p103
      %s105 = ssub.s32 %s29, %s48
      %s106 = ssub.s32 %s31, %s40
      %s107 = sor.u32 %s105, %s106
      %p108 = scmp.eq.s32.totalorder %s107, 0
      %s110 = sadd.s32 %s109, 1
      %s111 = scalar_select %p108, %s109, %s110
      %p114 = pneg %p108
      %p115 = scmp.eq.s32.totalorder %s22, 7
      %p116 = por %p114, %p115
      %p117 = scmp.ne.s32.totalorder %s109, %s112
      %p118 = scmp.eq.s32.totalorder %s22, 0
      %p119 = por %p117, %p118
      %p120 = scmp.ne.s32.totalorder %s109, %s112
      %p121 = scmp.eq.s32.totalorder %s27, 7
      %p122 = por %p120, %p121
      %p123 = scmp.ne.s32.totalorder %s112, %s113
      %p124 = scmp.eq.s32.totalorder %s27, 0
      %p125 = por %p123, %p124
      %p126 = scmp.ne.s32.totalorder %s112, %s113
      %p127 = scmp.eq.s32.totalorder %s28, 7
      %p128 = por %p126, %p127
      %p130 = scmp.ne.s32.totalorder %s113, %s129
      %p131 = scmp.eq.s32.totalorder %s28, 0
      %p132 = por %p130, %p131
      %s133 = ssub.s32 %s29, %s48
      %s134 = ssub.s32 %s30, %s44
      %s135 = sor.u32 %s133, %s134
      %s136 = ssub.s32 %s31, %s40
      %s137 = sor.u32 %s135, %s136
      %p138 = scmp.eq.s32.totalorder %s137, 0
      %s140 = sadd.s32 %s139, 1
      %s141 = scalar_select %p138, %s139, %s140
      %p144 = pneg %p138
      %p145 = scmp.eq.s32.totalorder %s22, 7
      %p146 = por %p144, %p145
      %p147 = scmp.ne.s32.totalorder %s139, %s142
      %p148 = scmp.eq.s32.totalorder %s22, 0
      %p149 = por %p147, %p148
      %p150 = scmp.ne.s32.totalorder %s139, %s142
      %p151 = scmp.eq.s32.totalorder %s27, 7
      %p152 = por %p150, %p151
      %p153 = scmp.ne.s32.totalorder %s142, %s143
      %p154 = scmp.eq.s32.totalorder %s27, 0
      %p155 = por %p153, %p154
      %p156 = scmp.ne.s32.totalorder %s142, %s143
      %p157 = scmp.eq.s32.totalorder %s28, 7
      %p158 = por %p156, %p157
      %p160 = scmp.ne.s32.totalorder %s143, %s159
      %p161 = scmp.eq.s32.totalorder %s28, 0
      %p162 = por %p160, %p161
      %s163 = ssub.s32 %s29, %s48
      %s164 = ssub.s32 %s30, %s44
      %s165 = sor.u32 %s163, %s164
      %p166 = scmp.eq.s32.totalorder %s165, 0
      %s168 = sadd.s32 %s167, 1
      %s169 = scalar_select %p166, %s167, %s168
      %p172 = pneg %p166
      %p173 = scmp.eq.s32.totalorder %s22, 7
      %p174 = por %p172, %p173
      %p175 = scmp.ne.s32.totalorder %s167, %s170
      %p176 = scmp.eq.s32.totalorder %s22, 0
      %p177 = por %p175, %p176
      %p178 = scmp.ne.s32.totalorder %s167, %s170
      %p179 = scmp.eq.s32.totalorder %s27, 7
      %p180 = por %p178, %p179
      %p181 = scmp.ne.s32.totalorder %s170, %s171
      %p182 = scmp.eq.s32.totalorder %s27, 0
      %p183 = por %p181, %p182
      %p184 = scmp.ne.s32.totalorder %s170, %s171
      %p185 = scmp.eq.s32.totalorder %s28, 7
      %p186 = por %p184, %p185
      %p188 = scmp.ne.s32.totalorder %s171, %s187
      %p189 = scmp.eq.s32.totalorder %s28, 0
      %p190 = por %p188, %p189
      %p191 = scmp.le.s32.totalorder 1, %s22
      %p192 = scmp.lt.s32.totalorder %s22, 9
      %p193 = pnand %p191, %p192
      %p194 = pneg %p193
      // Predicated region
      $region9: #{tpu_custom_call.1} parent=5 // pred_check
        _
      $region10: #{tpu_custom_call.1} parent=5 // pred_check_branch
        %196 = sbr.rel (%p193) target = $region12
      $region11: #{tpu_custom_call.1} parent=5 // pred_region
        %s197 = ssub.s32 %s22, 1
      $region12: #{tpu_custom_call.1} parent=5 // pred_fallthru
        _
      %p198 = scmp.lt.s32.totalorder %s22, 8
      // Predicated region
      $region13: #{tpu_custom_call.1} parent=5 // pred_check
        %p199 = pneg %p198
      $region14: #{tpu_custom_call.1} parent=5 // pred_check_branch
        %201 = sbr.rel (%p199) target = $region16
      $region15: #{tpu_custom_call.1} parent=5 // pred_region
        // Predicated region
        $region17: #{tpu_custom_call.1} parent=15 // pred_check
          %p202 = pneg %p63
        $region18: #{tpu_custom_call.1} parent=15 // pred_check_branch
          %204 = sbr.rel (%p202) target = $region20
        $region19: #{tpu_custom_call.1} parent=15 // pred_region
          %s205 = sand.u32 %s53, 1
          %s206 = scalar_lea.sflag [#allocation6], %s205
          %s207 = sand.u32 %s53, 1
          %s208 = smul.addr %s207, 8
          %s209 = scalar_lea.vmem [#allocation5], %s208
          %s211 = ssub.s32 128, 128
          %212 = vsyncadd %s206, %s211
          %s213 = sadd.s32 %s30, %s29
          %s214 = smul.addr %s213, 128
          %s215 = scalar_lea.hbm %s0, %s214
          %s217 = sshll.u32 %s209, 4
          %s218 = int_to_ptr.vmem [resolvable:$true] %s217
          %220 = dma.hbm_to_vmem [thread:$0]  %s215, 128, %s218, %s206
        $region20: #{tpu_custom_call.1} parent=15 // pred_fallthru
          _
        // Predicated region
        $region21: #{tpu_custom_call.1} parent=15 // pred_check
          %p221 = pneg %p91
        $region22: #{tpu_custom_call.1} parent=15 // pred_check_branch
          %223 = sbr.rel (%p221) target = $region24
        $region23: #{tpu_custom_call.1} parent=15 // pred_region
          %s224 = sand.u32 %s22, 1
          %s225 = scalar_lea.sflag [#allocation9], %s224
          %s226 = sand.u32 %s81, 1
          %s227 = smul.addr %s226, 128
          %s228 = scalar_lea.vmem [#allocation8], %s227
          %s229 = smul.u32 16, %s31
          %s231 = ssub.s32 2048, 2048
          %232 = vsyncadd %s225, %s231
          %s233 = smul.addr %s29, 16
          %s234 = sadd.s32 %s229, %s233
          %s235 = smul.addr %s234, 128
          %s236 = scalar_lea.hbm %s1, %s235
          %s237 = sshll.u32 %s228, 4
          %s238 = int_to_ptr.vmem [resolvable:$true] %s237
          %243 = dma.hbm_to_vmem [thread:$0]  %s236, 2048, %s238, %s225, 128, 128, 8
        $region24: #{tpu_custom_call.1} parent=15 // pred_fallthru
          _
        // Predicated region
        $region25: #{tpu_custom_call.1} parent=15 // pred_check
          %p244 = pneg %p119
        $region26: #{tpu_custom_call.1} parent=15 // pred_check_branch
          %246 = sbr.rel (%p244) target = $region28
        $region27: #{tpu_custom_call.1} parent=15 // pred_region
          %s247 = sand.u32 %s22, 1
          %s248 = scalar_lea.sflag [#allocation9], %s247
          %s249 = sand.u32 %s109, 1
          %s250 = smul.addr %s249, 128
          %s251 = scalar_lea.vmem [#allocation10], %s250
          %s252 = smul.u32 16, %s31
          %s254 = ssub.s32 2048, 2048
          %255 = vsyncadd %s248, %s254
          %s256 = smul.addr %s29, 16
          %s257 = sadd.s32 %s252, %s256
          %s258 = smul.addr %s257, 128
          %s259 = scalar_lea.hbm %s2, %s258
          %s260 = sshll.u32 %s251, 4
          %s261 = int_to_ptr.vmem [resolvable:$true] %s260
          %266 = dma.hbm_to_vmem [thread:$0]  %s259, 2048, %s261, %s248, 128, 128, 8
        $region28: #{tpu_custom_call.1} parent=15 // pred_fallthru
          _
        // Predicated region
        $region29: #{tpu_custom_call.1} parent=15 // pred_check
          %p267 = pneg %p149
        $region30: #{tpu_custom_call.1} parent=15 // pred_check_branch
          %269 = sbr.rel (%p267) target = $region32
        $region31: #{tpu_custom_call.1} parent=15 // pred_region
          %s270 = sand.u32 %s139, 1
          %s271 = scalar_lea.sflag [#allocation12], %s270
          %s272 = sand.u32 %s139, 1
          %s273 = smul.addr %s272, 2
          %s274 = scalar_lea.vmem [#allocation11], %s273
          %s276 = ssub.s32 32, 32
          %277 = vsyncadd %s271, %s276
          %s278 = sadd.s32 %s31, %s30
          %s279 = sadd.s32 %s278, %s29
          %s280 = smul.addr %s279, 32
          %s281 = scalar_lea.hbm %s3, %s280
          %s283 = sshll.u32 %s274, 4
          %s284 = int_to_ptr.vmem [resolvable:$true] %s283
          %286 = dma.hbm_to_vmem [thread:$0]  %s281, 32, %s284, %s271
        $region32: #{tpu_custom_call.1} parent=15 // pred_fallthru
          _
      $region16: #{tpu_custom_call.1} parent=5 // pred_fallthru
        _
      %p287 = scmp.le.s32.totalorder 1, %s22
      %p288 = scmp.lt.s32.totalorder %s22, 9
      %p289 = pnand %p287, %p288
      %p290 = pneg %p289
      // Predicated region
      $region33: #{tpu_custom_call.1} parent=5 // pred_check
        _
      $region34: #{tpu_custom_call.1} parent=5 // pred_check_branch
        %292 = sbr.rel (%p289) target = $region36
      $region35: #{tpu_custom_call.1} parent=5 // pred_region
        %s293 = ssub.s32 %s22, 1
        %s294 = sand.u32 %s56, 1
        %s295 = scalar_lea.sflag [#allocation6], %s294
        %s296 = sand.u32 %s56, 1
        %s297 = smul.addr %s296, 8
        %s298 = scalar_lea.vmem [#allocation5], %s297
        // Predicated region
        $region37: #{tpu_custom_call.1} parent=35 // pred_check
          %p299 = pneg %p69
        $region38: #{tpu_custom_call.1} parent=35 // pred_check_branch
          %301 = sbr.rel (%p299) target = $region40
        $region39: #{tpu_custom_call.1} parent=35 // pred_region
          %302 = dma.done %s295, 128
        $region40: #{tpu_custom_call.1} parent=35 // pred_fallthru
          _
        %s303 = sand.u32 %s27, 1
        %s304 = scalar_lea.sflag [#allocation9], %s303
        %s305 = sand.u32 %s84, 1
        %s306 = smul.addr %s305, 128
        %s307 = scalar_lea.vmem [#allocation8], %s306
        // Predicated region
        $region41: #{tpu_custom_call.1} parent=35 // pred_check
          %p308 = pneg %p97
        $region42: #{tpu_custom_call.1} parent=35 // pred_check_branch
          %310 = sbr.rel (%p308) target = $region44
        $region43: #{tpu_custom_call.1} parent=35 // pred_region
          %311 = dma.done %s304, 2048
        $region44: #{tpu_custom_call.1} parent=35 // pred_fallthru
          _
        %s312 = sand.u32 %s27, 1
        %s313 = scalar_lea.sflag [#allocation9], %s312
        %s314 = sand.u32 %s112, 1
        %s315 = smul.addr %s314, 128
        %s316 = scalar_lea.vmem [#allocation10], %s315
        // Predicated region
        $region45: #{tpu_custom_call.1} parent=35 // pred_check
          %p317 = pneg %p125
        $region46: #{tpu_custom_call.1} parent=35 // pred_check_branch
          %319 = sbr.rel (%p317) target = $region48
        $region47: #{tpu_custom_call.1} parent=35 // pred_region
          %320 = dma.done %s313, 2048
        $region48: #{tpu_custom_call.1} parent=35 // pred_fallthru
          _
        %s321 = sand.u32 %s142, 1
        %s322 = scalar_lea.sflag [#allocation12], %s321
        %s323 = sand.u32 %s142, 1
        %s324 = smul.addr %s323, 2
        %s325 = scalar_lea.vmem [#allocation11], %s324
        // Predicated region
        $region49: #{tpu_custom_call.1} parent=35 // pred_check
          %p326 = pneg %p155
        $region50: #{tpu_custom_call.1} parent=35 // pred_check_branch
          %328 = sbr.rel (%p326) target = $region52
        $region51: #{tpu_custom_call.1} parent=35 // pred_region
          %329 = dma.done %s322, 32
        $region52: #{tpu_custom_call.1} parent=35 // pred_fallthru
          _
        %s330 = sand.u32 %s56, 1
        %s331 = scalar_lea.sflag [#allocation6], %s330
        %s332 = sand.u32 %s56, 1
        %s333 = smul.addr %s332, 8
        %s334 = scalar_lea.vmem [#allocation5], %s333
        %p335 = pneg %p69
        %p336 = pneg %p66
        %s337 = sand.u32 %s27, 1
        %s338 = scalar_lea.sflag [#allocation9], %s337
        %s339 = sand.u32 %s84, 1
        %s340 = smul.addr %s339, 128
        %s341 = scalar_lea.vmem [#allocation8], %s340
        %p342 = pneg %p97
        %p343 = pneg %p94
        %s344 = sand.u32 %s27, 1
        %s345 = scalar_lea.sflag [#allocation9], %s344
        %s346 = sand.u32 %s112, 1
        %s347 = smul.addr %s346, 128
        %s348 = scalar_lea.vmem [#allocation10], %s347
        %p349 = pneg %p125
        %p350 = pneg %p122
        %s351 = sand.u32 %s142, 1
        %s352 = scalar_lea.sflag [#allocation12], %s351
        %s353 = sand.u32 %s142, 1
        %s354 = smul.addr %s353, 2
        %s355 = scalar_lea.vmem [#allocation11], %s354
        %p356 = pneg %p155
        %p357 = pneg %p152
        %p358 = pneg %p183
        %p359 = pneg %p180
        %s360 = sand.u32 %s170, 1
        %s361 = scalar_lea.sflag [#allocation7], %s360
        %s362 = sand.u32 %s170, 1
        %s363 = smul.addr %s362, 8
        %s364 = scalar_lea.vmem [#allocation13], %s363
        %s365 = smul.u32 16, %s34
        %s366 = smul.u32 16, %s34
        %v369 = vld [vmem:[%s325] sm:$0x3]
        %vm370 = vnez %v369
        %p371 = scmp.eq.s32.totalorder %s34, 0
        // Predicated region
        $region53: #{tpu_custom_call.1} parent=35 // pred_check
          %p372 = pneg %p371
        $region54: #{tpu_custom_call.1} parent=35 // pred_check_branch
          %374 = sbr.rel (%p372) target = $region56
        $region55: #{tpu_custom_call.1} parent=35 // pred_region
          %vm375 = vcmask 7168
          %376 = vst.msk [vmem:[#allocation2] sm:$0xff] %vm375, -inf
          %377 = vst.msk [vmem:[#allocation3] sm:$0xff] %vm375, 0.0
          %378 = vst [vmem:[#allocation4] sm:$0xff] 0.0
        $region56: #{tpu_custom_call.1} parent=35 // pred_fallthru
          _
        %v379 = vld [vmem:[%s298] sm:$0xff]
        %v380 = vmul.f32 %v379, 0.17677669
        %v381 = vld [vmem:[%s307] sm:$0xff]
        %v382 = vld [vmem:[%s307 + $0x8] sm:$0xff]
        %v383 = vld [vmem:[%s307 + $0x10] sm:$0xff]
        %v384 = vld [vmem:[%s307 + $0x18] sm:$0xff]
        %v385 = vld [vmem:[%s307 + $0x20] sm:$0xff]
        %v386 = vld [vmem:[%s307 + $0x28] sm:$0xff]
        %v387 = vld [vmem:[%s307 + $0x30] sm:$0xff]
        %v388 = vld [vmem:[%s307 + $0x38] sm:$0xff]
        %v389 = vld [vmem:[%s307 + $0x40] sm:$0xff]
        %v390 = vld [vmem:[%s307 + $0x48] sm:$0xff]
        %v391 = vld [vmem:[%s307 + $0x50] sm:$0xff]
        %v392 = vld [vmem:[%s307 + $0x58] sm:$0xff]
        %v393 = vld [vmem:[%s307 + $0x60] sm:$0xff]
        %v394 = vld [vmem:[%s307 + $0x68] sm:$0xff]
        %v395 = vld [vmem:[%s307 + $0x70] sm:$0xff]
        %v396 = vld [vmem:[%s307 + $0x78] sm:$0xff]
        %397 = vmatprep.subr.mxu0 0.0
        %398 = vmatpush1.xpose.msra.mxu0 %v381
        %399 = vmatprep.subr.mxu0 0.0
        %400 = vmatpush1.xpose.msra.mxu0 %v382
        %401 = vmatprep.subr.mxu0 0.0
        %402 = vmatpush1.xpose.msra.mxu0 %v383
        %403 = vmatprep.subr.mxu0 0.0
        %404 = vmatpush1.xpose.msra.mxu0 %v384
        %405 = vmatprep.subr.mxu0 0.0
        %406 = vmatpush1.xpose.msra.mxu0 %v385
        %407 = vmatprep.subr.mxu0 0.0
        %408 = vmatpush1.xpose.msra.mxu0 %v386
        %409 = vmatprep.subr.mxu0 0.0
        %410 = vmatpush1.xpose.msra.mxu0 %v387
        %411 = vmatprep.subr.mxu0 0.0
        %412 = vmatpush1.xpose.msra.mxu0 %v388
        %413 = vmatprep.subr.mxu0 0.0
        %414 = vmatpush1.xpose.msra.mxu0 %v389
        %415 = vmatprep.subr.mxu0 0.0
        %416 = vmatpush1.xpose.msra.mxu0 %v390
        %417 = vmatprep.subr.mxu0 0.0
        %418 = vmatpush1.xpose.msra.mxu0 %v391
        %419 = vmatprep.subr.mxu0 0.0
        %420 = vmatpush1.xpose.msra.mxu0 %v392
        %421 = vmatprep.subr.mxu0 0.0
        %422 = vmatpush1.xpose.msra.mxu0 %v393
        %423 = vmatprep.subr.mxu0 0.0
        %424 = vmatpush1.xpose.msra.mxu0 %v394
        %425 = vmatprep.subr.mxu0 0.0
        %426 = vmatpush1.xpose.msra.mxu0 %v395
        %427 = vmatprep.subr.mxu0 0.0
        %428 = vmatpush1.xpose.msra.mxu0 %v396
        %429 = vmatprep.subr.mxu0 0.0
        %430 = vmatpush1.xpose.msra.mxu0 0.0
        %431 = vmatprep.subr.mxu0 0.0
        %432 = vmatpush1.xpose.msra.mxu0 0.0
        %433 = vmatprep.subr.mxu0 0.0
        %434 = vmatpush1.xpose.msra.mxu0 0.0
        %435 = vmatprep.subr.mxu0 0.0
        %436 = vmatpush1.xpose.msra.mxu0 0.0
        %437 = vmatprep.subr.mxu0 0.0
        %438 = vmatpush1.xpose.msra.mxu0 0.0
        %439 = vmatprep.subr.mxu0 0.0
        %440 = vmatpush1.xpose.msra.mxu0 0.0
        %441 = vmatprep.subr.mxu0 0.0
        %442 = vmatpush1.xpose.msra.mxu0 0.0
        %443 = vmatprep.subr.mxu0 0.0
        %444 = vmatpush1.xpose.msra.mxu0 0.0
        %445 = vmatprep.subr.mxu0 0.0
        %446 = vmatpush1.xpose.msra.mxu0 0.0
        %447 = vmatprep.subr.mxu0 0.0
        %448 = vmatpush1.xpose.msra.mxu0 0.0
        %449 = vmatprep.subr.mxu0 0.0
        %450 = vmatpush1.xpose.msra.mxu0 0.0
        %451 = vmatprep.subr.mxu0 0.0
        %452 = vmatpush1.xpose.msra.mxu0 0.0
        %453 = vmatprep.subr.mxu0 0.0
        %454 = vmatpush1.xpose.msra.mxu0 0.0
        %455 = vmatprep.subr.mxu0 0.0
        %456 = vmatpush1.xpose.msra.mxu0 0.0
        %457 = vmatprep.subr.mxu0 0.0
        %458 = vmatpush1.xpose.msra.mxu0 0.0
        %459 = vmatprep.subr.mxu0 0.0
        %460 = vmatpush1.xpose.msra.mxu0 0.0
        %461 = vmatprep.mubr.f32.mxu0 0.0
        %462 = vmatmul.mubr.f32.gmra.mrb[0].mxu0 %v380
        %v463 = vpop.f32.mrb[0].mxu0
        %v464 = vadd.f32 0.0, %v463
        %v465 = vpop.f32.mrb[0].mxu0
        %466 = vdwg.mxu0
        %v467 = vsel %vm370, 16843009, 0
        %v468 = vunpack.c.0.s8 %v467
        %vm469 = vcmp.ne.s32.totalorder %v468, 0
        %v470 = vsel %vm469, %v464, -2.3819763e+38
        %v471 = vld [vmem:[#allocation2] sm:$0xff]
        %472 = vmax.xlane.f32.xlu0 %v470
        %v473 = vpop.xlane.xlu0 %472
        %v474 = vmax.f32 %v471, %v473
        %v475 = vsub.f32 %v471, %v474
        %v476 = vmul.f32 %v475, 1.442695
        %v477 = vpow.pop %v476
        %479 = vset.pattern.permute.xlu0 0
        %480 = vperm.xlu0 %479, %v474
        %v481 = vpop.permute.xlu0 %480
        %v483 = vsub.f32 %v470, %v481
        %v484 = vmul.f32 %v483, 1.442695
        %v485 = vpow.pop %v484
        %v486 = vld [vmem:[#allocation3] sm:$0xff]
        %v487 = vmul.f32 %v477, %v486
        %488 = vadd.xlane.f32.xlu0 %v485
        %v489 = vpop.xlane.xlu0 %488
        %v490 = vadd.f32 %v487, %v489
        %vm491 = vcmask 7168
        %492 = vst.msk [vmem:[#allocation3] sm:$0xff] %vm491, %v490
        %v493 = vld [vmem:[#allocation4] sm:$0xff]
        %495 = vset.pattern.permute.xlu0 0
        %496 = vperm.xlu0 %495, %v477
        %v497 = vpop.permute.xlu0 %496
        %v499 = vmul.f32 %v497, %v493
        %v500 = vld [vmem:[%s316] sm:$0xff]
        %v501 = vld [vmem:[%s316 + $0x8] sm:$0xff]
        %v502 = vld [vmem:[%s316 + $0x10] sm:$0xff]
        %v503 = vld [vmem:[%s316 + $0x18] sm:$0xff]
        %v504 = vld [vmem:[%s316 + $0x20] sm:$0xff]
        %v505 = vld [vmem:[%s316 + $0x28] sm:$0xff]
        %v506 = vld [vmem:[%s316 + $0x30] sm:$0xff]
        %v507 = vld [vmem:[%s316 + $0x38] sm:$0xff]
        %v508 = vld [vmem:[%s316 + $0x40] sm:$0xff]
        %v509 = vld [vmem:[%s316 + $0x48] sm:$0xff]
        %v510 = vld [vmem:[%s316 + $0x50] sm:$0xff]
        %v511 = vld [vmem:[%s316 + $0x58] sm:$0xff]
        %v512 = vld [vmem:[%s316 + $0x60] sm:$0xff]
        %v513 = vld [vmem:[%s316 + $0x68] sm:$0xff]
        %v514 = vld [vmem:[%s316 + $0x70] sm:$0xff]
        %v515 = vld [vmem:[%s316 + $0x78] sm:$0xff]
        %516 = vmatprep.subr.mxu0 0.0
        %517 = vmatpush1.msra.mxu0 %v500
        %518 = vmatprep.subr.mxu0 0.0
        %519 = vmatpush1.msra.mxu0 %v501
        %520 = vmatprep.subr.mxu0 0.0
        %521 = vmatpush1.msra.mxu0 %v502
        %522 = vmatprep.subr.mxu0 0.0
        %523 = vmatpush1.msra.mxu0 %v503
        %524 = vmatprep.subr.mxu0 0.0
        %525 = vmatpush1.msra.mxu0 %v504
        %526 = vmatprep.subr.mxu0 0.0
        %527 = vmatpush1.msra.mxu0 %v505
        %528 = vmatprep.subr.mxu0 0.0
        %529 = vmatpush1.msra.mxu0 %v506
        %530 = vmatprep.subr.mxu0 0.0
        %531 = vmatpush1.msra.mxu0 %v507
        %532 = vmatprep.subr.mxu0 0.0
        %533 = vmatpush1.msra.mxu0 %v508
        %534 = vmatprep.subr.mxu0 0.0
        %535 = vmatpush1.msra.mxu0 %v509
        %536 = vmatprep.subr.mxu0 0.0
        %537 = vmatpush1.msra.mxu0 %v510
        %538 = vmatprep.subr.mxu0 0.0
        %539 = vmatpush1.msra.mxu0 %v511
        %540 = vmatprep.subr.mxu0 0.0
        %541 = vmatpush1.msra.mxu0 %v512
        %542 = vmatprep.subr.mxu0 0.0
        %543 = vmatpush1.msra.mxu0 %v513
        %544 = vmatprep.subr.mxu0 0.0
        %545 = vmatpush1.msra.mxu0 %v514
        %546 = vmatprep.subr.mxu0 0.0
        %547 = vmatpush1.msra.mxu0 %v515
        %548 = vmatprep.subr.mxu0 0.0
        %549 = vmatpush1.msra.mxu0 0.0
        %550 = vmatprep.subr.mxu0 0.0
        %551 = vmatpush1.msra.mxu0 0.0
        %552 = vmatprep.subr.mxu0 0.0
        %553 = vmatpush1.msra.mxu0 0.0
        %554 = vmatprep.subr.mxu0 0.0
        %555 = vmatpush1.msra.mxu0 0.0
        %556 = vmatprep.subr.mxu0 0.0
        %557 = vmatpush1.msra.mxu0 0.0
        %558 = vmatprep.subr.mxu0 0.0
        %559 = vmatpush1.msra.mxu0 0.0
        %560 = vmatprep.subr.mxu0 0.0
        %561 = vmatpush1.msra.mxu0 0.0
        %562 = vmatprep.subr.mxu0 0.0
        %563 = vmatpush1.msra.mxu0 0.0
        %564 = vmatprep.subr.mxu0 0.0
        %565 = vmatpush1.msra.mxu0 0.0
        %566 = vmatprep.subr.mxu0 0.0
        %567 = vmatpush1.msra.mxu0 0.0
        %568 = vmatprep.subr.mxu0 0.0
        %569 = vmatpush1.msra.mxu0 0.0
        %570 = vmatprep.subr.mxu0 0.0
        %571 = vmatpush1.msra.mxu0 0.0
        %572 = vmatprep.subr.mxu0 0.0
        %573 = vmatpush1.msra.mxu0 0.0
        %574 = vmatprep.subr.mxu0 0.0
        %575 = vmatpush1.msra.mxu0 0.0
        %576 = vmatprep.subr.mxu0 0.0
        %577 = vmatpush1.msra.mxu0 0.0
        %578 = vmatprep.subr.mxu0 0.0
        %579 = vmatpush1.msra.mxu0 0.0
        %580 = vmatprep.mubr.f32.mxu0 0.0
        %581 = vmatmul.mubr.f32.gmra.mrb[0].mxu0 %v485
        %v582 = vpop.f32.mrb[0].mxu0
        %v583 = vadd.f32 0.0, %v582
        %v584 = vpop.f32.mrb[0].mxu0
        %585 = vdwg.mxu0
        %v586 = vadd.f32 %v499, %v583
        %587 = vst [vmem:[#allocation4] sm:$0xff] %v586
        %588 = vst.msk [vmem:[#allocation2] sm:$0xff] %vm491, %v474
        // Predicated region
        $region57: #{tpu_custom_call.1} parent=35 // pred_check
          %p589 = pneg %p371
        $region58: #{tpu_custom_call.1} parent=35 // pred_check_branch
          %591 = sbr.rel (%p589) target = $region60
        $region59: #{tpu_custom_call.1} parent=35 // pred_region
          %v592 = vld [vmem:[#allocation3] sm:$0xff]
          %v593 = vrcp.pop %v592
          %v594 = vld [vmem:[#allocation4] sm:$0xff]
          %596 = vset.pattern.permute.xlu0 0
          %597 = vperm.xlu0 %596, %v593
          %v598 = vpop.permute.xlu0 %597
          %v600 = vmul.f32 %v594, %v598
          %601 = vst [vmem:[%s364] sm:$0xff] %v600
        $region60: #{tpu_custom_call.1} parent=35 // pred_fallthru
          _
        %s602 = sand.u32 %s170, 1
        %s603 = scalar_lea.sflag [#allocation7], %s602
        %s604 = sand.u32 %s170, 1
        %s605 = smul.addr %s604, 8
        %s606 = scalar_lea.vmem [#allocation13], %s605
        // Predicated region
        $region61: #{tpu_custom_call.1} parent=35 // pred_check
          %p607 = pneg %p180
        $region62: #{tpu_custom_call.1} parent=35 // pred_check_branch
          %609 = sbr.rel (%p607) target = $region64
        $region63: #{tpu_custom_call.1} parent=35 // pred_region
          %s611 = ssub.s32 128, 128
          %612 = vsyncadd %s603, %s611
          %s613 = sadd.s32 %s33, %s32
          %s614 = smul.addr %s613, 128
          %s615 = scalar_lea.hbm %s4, %s614
          %s617 = sshll.u32 %s606, 4
          %s618 = int_to_ptr.vmem [resolvable:$true] %s617
          %620 = dma.vmem_to_hbm [thread:$0]  %s618, 128, %s615, %s603
        $region64: #{tpu_custom_call.1} parent=35 // pred_fallthru
          _
      $region36: #{tpu_custom_call.1} parent=5 // pred_fallthru
        _
      %p621 = scmp.le.s32.totalorder 2, %s22
      // Predicated region
      $region65: #{tpu_custom_call.1} parent=5 // pred_check
        %p622 = pneg %p621
      $region66: #{tpu_custom_call.1} parent=5 // pred_check_branch
        %624 = sbr.rel (%p622) target = $region68
      $region67: #{tpu_custom_call.1} parent=5 // pred_region
        %s625 = ssub.s32 %s22, 2
        // Predicated region
        $region69: #{tpu_custom_call.1} parent=67 // pred_check
          %p626 = pneg %p186
        $region70: #{tpu_custom_call.1} parent=67 // pred_check_branch
          %628 = sbr.rel (%p626) target = $region72
        $region71: #{tpu_custom_call.1} parent=67 // pred_region
          %s629 = sand.u32 %s171, 1
          %s630 = scalar_lea.sflag [#allocation7], %s629
          %s631 = sand.u32 %s171, 1
          %s632 = smul.addr %s631, 8
          %s633 = scalar_lea.vmem [#allocation13], %s632
          %634 = dma.done %s630, 128
        $region72: #{tpu_custom_call.1} parent=67 // pred_fallthru
          _
      $region68: #{tpu_custom_call.1} parent=5 // pred_fallthru
        _
    $region6: #{tpu_custom_call.1} parent=1 // loop_footer
      %s26 = sadd.s32 1, %s22
    $region7: #{tpu_custom_call.1} parent=1 // loop_footer_branch
      %21 = sbr.rel target = $region3
    $region8: #{tpu_custom_call.1} parent=1 // loop_exit
      _
    %635 = vsyncpa [#allocation6], 1
    %s636 = scalar_lea.sflag [#allocation6], 1
    %637 = vsyncpa %s636, 1
    %638 = vsyncpa [#allocation9], 1
    %s639 = scalar_lea.sflag [#allocation9], 1
    %640 = vsyncpa %s639, 1
    %641 = vsyncpa [#allocation12], 1
    %s642 = scalar_lea.sflag [#allocation12], 1
    %643 = vsyncpa %s642, 1
    %644 = vsyncpa [#allocation7], 1
    %s645 = scalar_lea.sflag [#allocation7], 1
    %646 = vsyncpa %s645, 1

</llo_original>
